<compile_context>
chip_gen: v6e
topology: v6e:2x2x1
jax: 0.10.0
libtpu: 0.0.40
codegen_flags: <defaults>
</compile_context>

<pallas_src>
import jax
import jax.numpy as jnp
from jax import lax
from jax.experimental import pallas as pl
from jax.experimental.pallas import tpu as pltpu


def _adaptive_rmsnorm_kernel(x_ref, gamma_ref, beta_ref, o_ref):
    # x_ref: (1, TS, D) sequence tile; gamma_ref/beta_ref: (1, 1, D) f32
    # (gamma already includes the sqrt(D) scale).
    x = x_ref[0]                                     # (TS, D), I/O dtype
    g = gamma_ref[0]                                 # (1, D) f32
    b = beta_ref[0]                                  # (1, D) f32

    # Squared-L2 reduced in f32.  F.normalize clamp:
    #   x / max(||x||, 1e-12)  ==  x * rsqrt(max(||x||^2, 1e-24)).
    xf = x.astype(jnp.float32)
    ss = jnp.sum(xf * xf, axis=-1, keepdims=True)    # (TS, 1)
    inv = lax.rsqrt(jnp.maximum(ss, 1e-24))          # EUP slot, not a VPU divide

    if o_ref.dtype == jnp.float32:
        o_ref[0] = xf * inv * g + b
    else:
        # Low-precision path (bf16 etc.): keep the scale/shift in the I/O dtype
        # (bf16 VALUs on v6e/v7x) to avoid a second tile-sized f32 temporary.
        dt = o_ref.dtype
        o_ref[0] = x * inv.astype(dt) * g.astype(dt) + b.astype(dt)


def _target_tile_bytes():
    """Per-step transfer target, sized per chip generation."""
    vmem_cap = 128 << 20
    try:
        info = pltpu.get_tpu_info()
        vmem_cap = int(getattr(info, "vmem_capacity_bytes", vmem_cap))
    except Exception:  # not on a TPU / API drift: safe default
        pass
    # v7x: 64 MiB VMEM but 3.2 TB/s HBM -> larger per-step transfers pay for the
    # ~0.35us step overhead.  v5e/v6e: ~2 MiB tiles already sit near roofline.
    return (4 << 20) if vmem_cap <= (64 << 20) else (2 << 20)


def _choose_block_s(B, S, D, dtype, target_bytes):
    """Sequence-tile rows: sublane-aligned for the dtype, ~target_bytes per tile,
    and at least ~8 total grid steps so both v7x TensorCores get pipeline depth."""
    itemsize = jnp.dtype(dtype).itemsize
    align = max(8, 32 // max(1, itemsize))      # 8 f32, 16 bf16, 32 int8/fp8
    if S <= align:
        return S
    max_rows = max(align, target_bytes // max(1, D * itemsize))
    bs = min(S, max_rows)
    bs = max(align, (bs // align) * align)
    # Prefer enough grid steps (megacore + double buffering) over maximal tiles.
    while bs > align and B * ((S + bs - 1) // bs) < 8:
        bs = max(align, ((bs // 2) // align) * align)
    return bs


def adaptive_rmsnorm(x, cond, wg, bg, wb, bb, *, block_s=None):
    """x: (B, S, D); cond: (B, C); wg/wb: (C, D) [i.e. W^T]; bg/bb: (D,)."""
    B, S, D = x.shape
    scale = float(D) ** 0.5

    # Adaptive affine params: tiny (B,C)@(C,D) matmul -> leave it to XLA and
    # fold the sqrt(D) scale into gamma (one fewer tile-sized multiply).
    cond_f32 = cond.astype(jnp.float32)
    gamma = (jnp.dot(cond_f32, wg.astype(jnp.float32)) + bg.astype(jnp.float32)) * scale
    beta = jnp.dot(cond_f32, wb.astype(jnp.float32)) + bb.astype(jnp.float32)
    gamma = gamma.reshape(B, 1, D)
    beta = beta.reshape(B, 1, D)

    itemsize = jnp.dtype(x.dtype).itemsize
    if block_s is None:
        block_s = _choose_block_s(B, S, D, x.dtype, _target_tile_bytes())
    block_s = max(1, min(int(block_s), S))
    # Ragged last block is fine: the reduction is per-row and padded rows are
    # masked on the output store, so no divisibility requirement on S.
    n_s = pl.cdiv(S, block_s)

    # VMEM budget: double-buffered in + out tiles, the in-kernel f32 upcast
    # temporaries, gamma/beta rows, plus slack; capped at 48 MiB to always fit
    # v7x's 64 MiB physical VMEM.
    tile_bytes = block_s * D * itemsize
    f32_tile_bytes = block_s * D * 4
    vmem_limit = int(4 * tile_bytes + 3 * f32_tile_bytes + 8 * D * 4 + (2 << 20))
    vmem_limit = min(max(vmem_limit, 4 << 20), 48 << 20)

    cost = pl.CostEstimate(
        flops=5 * B * S * D,
        transcendentals=B * S,
        bytes_accessed=2 * B * S * D * itemsize + 2 * B * D * 4,
    )

    return pl.pallas_call(
        _adaptive_rmsnorm_kernel,
        out_shape=jax.ShapeDtypeStruct((B, S, D), x.dtype),
        grid_spec=pltpu.PrefetchScalarGridSpec(
            num_scalar_prefetch=0,
            grid=(B, n_s),
            in_specs=[
                pl.BlockSpec((1, block_s, D), lambda b, s: (b, s, 0)),  # x tile
                pl.BlockSpec((1, 1, D), lambda b, s: (b, 0, 0)),        # gamma*sqrt(D)
                pl.BlockSpec((1, 1, D), lambda b, s: (b, 0, 0)),        # beta
            ],
            out_specs=pl.BlockSpec((1, block_s, D), lambda b, s: (b, s, 0)),
        ),
        compiler_params=pltpu.CompilerParams(
            dimension_semantics=("parallel", "parallel"),
            vmem_limit_bytes=vmem_limit,
        ),
        cost_estimate=cost,
    )(x, gamma, beta)


def adaptive_rmsnorm_ref(x, cond, wg, bg, wb, bb):
    """Plain-JAX reference mirroring the PyTorch forward."""
    D = x.shape[-1]
    scale = float(D) ** 0.5
    xf = x.astype(jnp.float32)
    l2 = jnp.sqrt(jnp.sum(xf * xf, axis=-1, keepdims=True))
    normed = xf / jnp.maximum(l2, 1e-12) * scale
    gamma = cond.astype(jnp.float32) @ wg.astype(jnp.float32) + bg
    beta = cond.astype(jnp.float32) @ wb.astype(jnp.float32) + bb
    return (normed * gamma[:, None, :] + beta[:, None, :]).astype(x.dtype)


if __name__ == "__main__":
    # Small demo shapes; D = 128 keeps the output stores lane-dense.
    B, S, D = 2, 16, 128
    C = D  # cond_dim defaults to dim

    key = jax.random.PRNGKey(0)
    kx, kc, kwg, kwb, kx2 = jax.random.split(key, 5)
    x = jax.random.normal(kx, (B, S, D), dtype=jnp.float32)
    cond = jax.random.normal(kc, (B, C), dtype=jnp.float32)

    # (1) Exact module init: to_gamma weight zeros / bias ones, to_beta zeros.
    wg0 = jnp.zeros((C, D), dtype=jnp.float32)   # stored as (in, out) = W^T
    bg0 = jnp.ones((D,), dtype=jnp.float32)
    wb0 = jnp.zeros((C, D), dtype=jnp.float32)
    bb0 = jnp.zeros((D,), dtype=jnp.float32)

    out0 = jax.block_until_ready(adaptive_rmsnorm(x, cond, wg0, bg0, wb0, bb0))
    ref0 = adaptive_rmsnorm_ref(x, cond, wg0, bg0, wb0, bb0)
    assert jnp.allclose(out0, ref0, atol=1e-5, rtol=1e-5), "mismatch (module init)"

    # (2) Random affine weights + a ragged sequence length (S not divisible by
    #     the tile) to exercise the gamma/beta path and the padded last block.
    S2 = 20
    x2 = jax.random.normal(kx2, (B, S2, D), dtype=jnp.float32)
    wg = 0.05 * jax.random.normal(kwg, (C, D), dtype=jnp.float32)
    wb = 0.05 * jax.random.normal(kwb, (C, D), dtype=jnp.float32)
    out1 = jax.block_until_ready(adaptive_rmsnorm(x2, cond, wg, bg0, wb, bb0, block_s=8))
    ref1 = adaptive_rmsnorm_ref(x2, cond, wg, bg0, wb, bb0)
    assert jnp.allclose(out1, ref1, atol=1e-5, rtol=1e-5), "mismatch (random affine, ragged S)"

    print("KERNEL_OK")
</pallas_src>

<mosaic_0001>
module attributes {stable_mosaic.version = 11 : i64} {
  func.func @_adaptive_rmsnorm_kernel(%arg0: i32, %arg1: i32, %arg2: memref<1x8x128xf32, #tpu.memory_space<vmem>>, %arg3: memref<1x1x128xf32, #tpu.memory_space<vmem>>, %arg4: memref<1x1x128xf32, #tpu.memory_space<vmem>>, %arg5: memref<1x8x128xf32, #tpu.memory_space<vmem>>) attributes {dimension_semantics = [#tpu.dimension_semantics<parallel>, #tpu.dimension_semantics<parallel>], iteration_bounds = array<i64: 2, 2>, scalar_prefetch = 0 : i64, scratch_operands = 0 : i64, tpu.core_type = #tpu.core_type<tc>, window_params = [{transform_indices = @transform_0, window_bounds = array<i64: 1, 8, 128>}, {transform_indices = @transform_1, window_bounds = array<i64: 1, 1, 128>}, {transform_indices = @transform_2, window_bounds = array<i64: 1, 1, 128>}, {transform_indices = @transform_3, window_bounds = array<i64: 1, 8, 128>}]} {
    %c0 = arith.constant 0 : index
    %c0_0 = arith.constant 0 : index
    %c0_1 = arith.constant 0 : index
    %0 = vector.load %arg2[%c0, %c0_0, %c0_1] : memref<1x8x128xf32, #tpu.memory_space<vmem>>, vector<1x8x128xf32>
    %1 = vector.shape_cast %0 : vector<1x8x128xf32> to vector<8x128xf32>
    %c0_2 = arith.constant 0 : index
    %c0_3 = arith.constant 0 : index
    %c0_4 = arith.constant 0 : index
    %2 = vector.load %arg3[%c0_2, %c0_3, %c0_4] : memref<1x1x128xf32, #tpu.memory_space<vmem>>, vector<1x1x128xf32>
    %3 = vector.shape_cast %2 : vector<1x1x128xf32> to vector<1x128xf32>
    %c0_5 = arith.constant 0 : index
    %c0_6 = arith.constant 0 : index
    %c0_7 = arith.constant 0 : index
    %4 = vector.load %arg4[%c0_5, %c0_6, %c0_7] : memref<1x1x128xf32, #tpu.memory_space<vmem>>, vector<1x1x128xf32>
    %5 = vector.shape_cast %4 : vector<1x1x128xf32> to vector<1x128xf32>
    %6 = arith.mulf %1, %1 : vector<8x128xf32>
    %cst = arith.constant dense<0.000000e+00> : vector<8xf32>
    %7 = vector.multi_reduction <add>, %6, %cst [1] : vector<8x128xf32> to vector<8xf32>
    %8 = vector.shape_cast %7 : vector<8xf32> to vector<8x1xf32>
    %cst_8 = arith.constant 1.000000e-24 : f32
    %9 = vector.broadcast %cst_8 : f32 to vector<8x1xf32>
    %10 = arith.maximumf %8, %9 : vector<8x1xf32>
    %11 = math.rsqrt %10 : vector<8x1xf32>
    %12 = vector.broadcast %11 : vector<8x1xf32> to vector<8x128xf32>
    %13 = arith.mulf %1, %12 : vector<8x128xf32>
    %14 = vector.broadcast %3 : vector<1x128xf32> to vector<8x128xf32>
    %15 = arith.mulf %13, %14 : vector<8x128xf32>
    %16 = vector.broadcast %5 : vector<1x128xf32> to vector<8x128xf32>
    %17 = arith.addf %15, %16 : vector<8x128xf32>
    %c0_9 = arith.constant 0 : index
    %c0_10 = arith.constant 0 : index
    %c0_11 = arith.constant 0 : index
    %18 = vector.load %arg5[%c0_9, %c0_10, %c0_11] : memref<1x8x128xf32, #tpu.memory_space<vmem>>, vector<1x8x128xf32>
    %19 = vector.shape_cast %18 : vector<1x8x128xf32> to vector<8x128xf32>
    %20 = vector.shape_cast %17 : vector<8x128xf32> to vector<1x8x128xf32>
    tpu.vector_store %arg5[%c0_9, %c0_10, %c0_11], %20 {strides = array<i32>} : memref<1x8x128xf32, #tpu.memory_space<vmem>>, vector<1x8x128xf32>,
    return
  }
  func.func @transform_0(%arg0: i32, %arg1: i32) -> (i32, i32, i32) {
    %c0_i32 = arith.constant 0 : i32
    %c0_i32_0 = arith.constant 0 : i32
    return %arg0, %arg1, %c0_i32 : i32, i32, i32
  }
  func.func @transform_1(%arg0: i32, %arg1: i32) -> (i32, i32, i32) {
    %c0_i32 = arith.constant 0 : i32
    %c0_i32_0 = arith.constant 0 : i32
    %c0_i32_1 = arith.constant 0 : i32
    return %arg0, %c0_i32, %c0_i32_0 : i32, i32, i32
  }
  func.func @transform_2(%arg0: i32, %arg1: i32) -> (i32, i32, i32) {
    %c0_i32 = arith.constant 0 : i32
    %c0_i32_0 = arith.constant 0 : i32
    %c0_i32_1 = arith.constant 0 : i32
    return %arg0, %c0_i32, %c0_i32_0 : i32, i32, i32
  }
  func.func @transform_3(%arg0: i32, %arg1: i32) -> (i32, i32, i32) {
    %c0_i32 = arith.constant 0 : i32
    %c0_i32_0 = arith.constant 0 : i32
    return %arg0, %arg1, %c0_i32 : i32, i32, i32
  }
}

</mosaic_0001>

<llo_original>
// kernel: tpu_custom_call.1
$region0: #{tpu_custom_call.1}
  #allocation0 [shape = 'u32[]', space=smem, size = 0x4, offset = 0x4, fixed_abs, tag = 'smem constant byte address 0x4 - core index']
  #allocation1 [shape = 'u32[144,128]{1,0:T(1,128)}', space=vmem, size = 0x12000, scoped, tag = 'internal scratch']
  %s0 = inlined_call_operand.hbm [shape: f32[2,16,128], index: 0, kind: input, shape index: {}]
  %s1 = inlined_call_operand.hbm [shape: f32[2,1,128], index: 1, kind: input, shape index: {}]
  %s2 = inlined_call_operand.vmem [shape: f32[2,1,128], index: 2, kind: input, shape index: {}]
  %s3 = inlined_call_operand.hbm [shape: f32[2,16,128], index: 3, kind: output, shape index: {}]
  %s4 = sld [smem:[#allocation0]]
  $region53: #{tpu_custom_call.1} parent=0
    _
  %s6 = ssub.s32 1, %s4
  %s7 = scalar_select 0, %s6, %s4
  $region1: #{tpu_custom_call.1} parent=0
    #allocation2 [shape = 'u8[8192]{0}', space=vmem, size = 0x2000, scoped, tag = 'input window, operand 0']
    #allocation3 [shape = 's32[2]{0}', space=sflag, size = 0x8, scoped, tag = 'scoped memory for tpu_custom_call.1']
    #allocation4 [shape = 's32[2]{0}', space=sflag, size = 0x8, scoped, tag = 'scoped memory for tpu_custom_call.1']
    #allocation5 [shape = 'u8[1024]{0}', space=vmem, size = 0x400, scoped, tag = 'input window, operand 1']
    #allocation6 [shape = 's32[2]{0}', space=sflag, size = 0x8, scoped, tag = 'scoped memory for tpu_custom_call.1']
    #allocation7 [shape = 'u8[8192]{0}', space=vmem, size = 0x2000, scoped, tag = 'output window, operand 0']
    %8 = vsyncpa [#allocation3], 0
    %s9 = scalar_lea.sflag [#allocation3], 1
    %10 = vsyncpa %s9, 0
    %11 = vsyncpa [#allocation6], 0
    %s12 = scalar_lea.sflag [#allocation6], 1
    %13 = vsyncpa %s12, 0
    %14 = vsyncpa [#allocation4], 0
    %s15 = scalar_lea.sflag [#allocation4], 1
    %16 = vsyncpa %s15, 0
    loop: start=0, step=1, limit=6
    $region2: #{tpu_custom_call.1} parent=1 // loop_pre_header
      _
    $region3: #{tpu_custom_call.1} parent=1 // loop_header
      %s18 = sphi 0, %s22
      %p19 = scmp.ge.s32.totalorder %s18, 6
      %s25 = sphi 0, %s37
      %s26 = sphi 0, %s33
      %s27 = sphi 0, %s25
      %s28 = sphi 0, %s26
      %s29 = sphi 0, %s27
      %s30 = sphi 0, %s28
      %s42 = sphi 0, %s44
      %s45 = sphi 0, %s42
      %s46 = sphi 0, %s45
      %s62 = sphi 0, %s46
      %s68 = sphi 0, %s70
      %s71 = sphi 0, %s68
      %s72 = sphi 0, %s71
      %s88 = sphi 0, %s72
      %s94 = sphi 0, %s96
      %s97 = sphi 0, %s94
      %s98 = sphi 0, %s97
      %s114 = sphi 0, %s98
      %s122 = sphi 0, %s124
      %s125 = sphi 0, %s122
      %s126 = sphi 0, %s125
      %s142 = sphi 0, %s126
    $region4: #{tpu_custom_call.1} parent=1 // loop_header_branch
      %21 = sbr.rel (%p19) target = $region8
    $region5: #{tpu_custom_call.1} parent=1 // loop_body
      %s23 = ssub.s32 %s18, 1
      %s24 = ssub.s32 %s18, 2
      %s31 = sadd.s32 1, %s26
      %p32 = scmp.ge.s32.totalorder %s31, 2
      %s33 = scalar_select %p32, 0, %s31
      %s34 = sadd.s32 1, %s25
      %s35 = scalar_select %p32, %s34, %s25
      %p36 = scmp.ge.s32.totalorder %s35, 2
      %s37 = scalar_select %p36, 0, %s35
      %s38 = ssub.s32 %s25, %s37
      %s39 = ssub.s32 %s26, %s33
      %s40 = sor.u32 %s38, %s39
      %p41 = scmp.eq.s32.totalorder %s40, 0
      %s43 = sadd.s32 %s42, 1
      %s44 = scalar_select %p41, %s42, %s43
      %p47 = pneg %p41
      %p48 = scmp.eq.s32.totalorder %s18, 3
      %p49 = por %p47, %p48
      %p50 = scmp.ne.s32.totalorder %s42, %s45
      %p51 = scmp.eq.s32.totalorder %s18, 0
      %p52 = por %p50, %p51
      %p53 = scmp.ne.s32.totalorder %s42, %s45
      %p54 = scmp.eq.s32.totalorder %s23, 3
      %p55 = por %p53, %p54
      %p56 = scmp.ne.s32.totalorder %s45, %s46
      %p57 = scmp.eq.s32.totalorder %s23, 0
      %p58 = por %p56, %p57
      %p59 = scmp.ne.s32.totalorder %s45, %s46
      %p60 = scmp.eq.s32.totalorder %s24, 3
      %p61 = por %p59, %p60
      %p63 = scmp.ne.s32.totalorder %s46, %s62
      %p64 = scmp.eq.s32.totalorder %s24, 0
      %p65 = por %p63, %p64
      %s66 = ssub.s32 %s25, %s37
      %p67 = scmp.eq.s32.totalorder %s66, 0
      %s69 = sadd.s32 %s68, 1
      %s70 = scalar_select %p67, %s68, %s69
      %p73 = pneg %p67
      %p74 = scmp.eq.s32.totalorder %s18, 3
      %p75 = por %p73, %p74
      %p76 = scmp.ne.s32.totalorder %s68, %s71
      %p77 = scmp.eq.s32.totalorder %s18, 0
      %p78 = por %p76, %p77
      %p79 = scmp.ne.s32.totalorder %s68, %s71
      %p80 = scmp.eq.s32.totalorder %s23, 3
      %p81 = por %p79, %p80
      %p82 = scmp.ne.s32.totalorder %s71, %s72
      %p83 = scmp.eq.s32.totalorder %s23, 0
      %p84 = por %p82, %p83
      %p85 = scmp.ne.s32.totalorder %s71, %s72
      %p86 = scmp.eq.s32.totalorder %s24, 3
      %p87 = por %p85, %p86
      %p89 = scmp.ne.s32.totalorder %s72, %s88
      %p90 = scmp.eq.s32.totalorder %s24, 0
      %p91 = por %p89, %p90
      %s92 = ssub.s32 %s25, %s37
      %p93 = scmp.eq.s32.totalorder %s92, 0
      %s95 = sadd.s32 %s94, 1
      %s96 = scalar_select %p93, %s94, %s95
      %p99 = pneg %p93
      %p100 = scmp.eq.s32.totalorder %s18, 3
      %p101 = por %p99, %p100
      %p102 = scmp.ne.s32.totalorder %s94, %s97
      %p103 = scmp.eq.s32.totalorder %s18, 0
      %p104 = por %p102, %p103
      %p105 = scmp.ne.s32.totalorder %s94, %s97
      %p106 = scmp.eq.s32.totalorder %s23, 3
      %p107 = por %p105, %p106
      %p108 = scmp.ne.s32.totalorder %s97, %s98
      %p109 = scmp.eq.s32.totalorder %s23, 0
      %p110 = por %p108, %p109
      %p111 = scmp.ne.s32.totalorder %s97, %s98
      %p112 = scmp.eq.s32.totalorder %s24, 3
      %p113 = por %p111, %p112
      %p115 = scmp.ne.s32.totalorder %s98, %s114
      %p116 = scmp.eq.s32.totalorder %s24, 0
      %p117 = por %p115, %p116
      %s118 = ssub.s32 %s25, %s37
      %s119 = ssub.s32 %s26, %s33
      %s120 = sor.u32 %s118, %s119
      %p121 = scmp.eq.s32.totalorder %s120, 0
      %s123 = sadd.s32 %s122, 1
      %s124 = scalar_select %p121, %s122, %s123
      %p127 = pneg %p121
      %p128 = scmp.eq.s32.totalorder %s18, 3
      %p129 = por %p127, %p128
      %p130 = scmp.ne.s32.totalorder %s122, %s125
      %p131 = scmp.eq.s32.totalorder %s18, 0
      %p132 = por %p130, %p131
      %p133 = scmp.ne.s32.totalorder %s122, %s125
      %p134 = scmp.eq.s32.totalorder %s23, 3
      %p135 = por %p133, %p134
      %p136 = scmp.ne.s32.totalorder %s125, %s126
      %p137 = scmp.eq.s32.totalorder %s23, 0
      %p138 = por %p136, %p137
      %p139 = scmp.ne.s32.totalorder %s125, %s126
      %p140 = scmp.eq.s32.totalorder %s24, 3
      %p141 = por %p139, %p140
      %p143 = scmp.ne.s32.totalorder %s126, %s142
      %p144 = scmp.eq.s32.totalorder %s24, 0
      %p145 = por %p143, %p144
      %p146 = scmp.le.s32.totalorder 1, %s18
      %p147 = scmp.lt.s32.totalorder %s18, 5
      %p148 = pnand %p146, %p147
      %p149 = pneg %p148
      // Predicated region
      $region9: #{tpu_custom_call.1} parent=5 // pred_check
        _
      $region10: #{tpu_custom_call.1} parent=5 // pred_check_branch
        %151 = sbr.rel (%p148) target = $region12
      $region11: #{tpu_custom_call.1} parent=5 // pred_region
        %s152 = ssub.s32 %s18, 1
      $region12: #{tpu_custom_call.1} parent=5 // pred_fallthru
        _
      %p153 = scmp.lt.s32.totalorder %s18, 4
      // Predicated region
      $region13: #{tpu_custom_call.1} parent=5 // pred_check
        %p154 = pneg %p153
      $region14: #{tpu_custom_call.1} parent=5 // pred_check_branch
        %156 = sbr.rel (%p154) target = $region16
      $region15: #{tpu_custom_call.1} parent=5 // pred_region
        // Predicated region
        $region17: #{tpu_custom_call.1} parent=15 // pred_check
          %p157 = pneg %p52
        $region18: #{tpu_custom_call.1} parent=15 // pred_check_branch
          %159 = sbr.rel (%p157) target = $region20
        $region19: #{tpu_custom_call.1} parent=15 // pred_region
          %s160 = sand.u32 %s42, 1
          %s161 = scalar_lea.sflag [#allocation3], %s160
          %s162 = sand.u32 %s42, 1
          %s163 = smul.addr %s162, 8
          %s164 = scalar_lea.vmem [#allocation2], %s163
          %s166 = ssub.s32 128, 128
          %167 = vsyncadd %s161, %s166
          %s168 = smul.addr %s25, 2
          %s169 = sadd.s32 %s26, %s168
          %s170 = smul.addr %s169, 128
          %s171 = scalar_lea.hbm %s0, %s170
          %s173 = sshll.u32 %s164, 4
          %s174 = int_to_ptr.vmem [resolvable:$true] %s173
          %176 = dma.hbm_to_vmem [thread:$0]  %s171, 128, %s174, %s161
        $region20: #{tpu_custom_call.1} parent=15 // pred_fallthru
          _
        // Predicated region
        $region21: #{tpu_custom_call.1} parent=15 // pred_check
          %p177 = pneg %p78
        $region22: #{tpu_custom_call.1} parent=15 // pred_check_branch
          %179 = sbr.rel (%p177) target = $region24
        $region23: #{tpu_custom_call.1} parent=15 // pred_region
          %s180 = sand.u32 %s68, 1
          %s181 = scalar_lea.sflag [#allocation6], %s180
          %s182 = sand.u32 %s68, 1
          %s183 = scalar_lea.vmem [#allocation5], %s182
          %s185 = ssub.s32 16, 16
          %186 = vsyncadd %s181, %s185
          %s187 = smul.addr %s25, 16
          %s188 = scalar_lea.hbm %s1, %s187
          %s190 = sshll.u32 %s183, 4
          %s191 = int_to_ptr.vmem [resolvable:$true] %s190
          %193 = dma.hbm_to_vmem [thread:$0]  %s188, 16, %s191, %s181
        $region24: #{tpu_custom_call.1} parent=15 // pred_fallthru
          _
        // Predicated region
        $region25: #{tpu_custom_call.1} parent=15 // pred_check
          %p194 = pneg %p104
        $region26: #{tpu_custom_call.1} parent=15 // pred_check_branch
          %196 = sbr.rel (%p194) target = $region28
        $region27: #{tpu_custom_call.1} parent=15 // pred_region
          %p197 = scmp.lt.s32.totalorder %s25, 1
          %s198 = scalar_select %p197, %s25, 1
          %s199 = scalar_lea.vmem %s2, %s198
        $region28: #{tpu_custom_call.1} parent=15 // pred_fallthru
          _
      $region16: #{tpu_custom_call.1} parent=5 // pred_fallthru
        _
      %p200 = scmp.le.s32.totalorder 1, %s18
      %p201 = scmp.lt.s32.totalorder %s18, 5
      %p202 = pnand %p200, %p201
      %p203 = pneg %p202
      // Predicated region
      $region29: #{tpu_custom_call.1} parent=5 // pred_check
        _
      $region30: #{tpu_custom_call.1} parent=5 // pred_check_branch
        %205 = sbr.rel (%p202) target = $region32
      $region31: #{tpu_custom_call.1} parent=5 // pred_region
        %s206 = ssub.s32 %s18, 1
        %s207 = sand.u32 %s45, 1
        %s208 = scalar_lea.sflag [#allocation3], %s207
        %s209 = sand.u32 %s45, 1
        %s210 = smul.addr %s209, 8
        %s211 = scalar_lea.vmem [#allocation2], %s210
        // Predicated region
        $region33: #{tpu_custom_call.1} parent=31 // pred_check
          %p212 = pneg %p58
        $region34: #{tpu_custom_call.1} parent=31 // pred_check_branch
          %214 = sbr.rel (%p212) target = $region36
        $region35: #{tpu_custom_call.1} parent=31 // pred_region
          %215 = dma.done %s208, 128
        $region36: #{tpu_custom_call.1} parent=31 // pred_fallthru
          _
        %s216 = sand.u32 %s71, 1
        %s217 = scalar_lea.sflag [#allocation6], %s216
        %s218 = sand.u32 %s71, 1
        %s219 = scalar_lea.vmem [#allocation5], %s218
        // Predicated region
        $region37: #{tpu_custom_call.1} parent=31 // pred_check
          %p220 = pneg %p84
        $region38: #{tpu_custom_call.1} parent=31 // pred_check_branch
          %222 = sbr.rel (%p220) target = $region40
        $region39: #{tpu_custom_call.1} parent=31 // pred_region
          %223 = dma.done %s217, 16
        $region40: #{tpu_custom_call.1} parent=31 // pred_fallthru
          _
        %s224 = sand.u32 %s45, 1
        %s225 = scalar_lea.sflag [#allocation3], %s224
        %s226 = sand.u32 %s45, 1
        %s227 = smul.addr %s226, 8
        %s228 = scalar_lea.vmem [#allocation2], %s227
        %p229 = pneg %p58
        %p230 = pneg %p55
        %s231 = sand.u32 %s71, 1
        %s232 = scalar_lea.sflag [#allocation6], %s231
        %s233 = sand.u32 %s71, 1
        %s234 = scalar_lea.vmem [#allocation5], %s233
        %p235 = pneg %p84
        %p236 = pneg %p81
        %p237 = scmp.lt.s32.totalorder %s27, 1
        %s238 = scalar_select %p237, %s27, 1
        %s239 = scalar_lea.vmem %s2, %s238
        %p240 = pneg %p110
        %p241 = pneg %p107
        %p242 = pneg %p138
        %p243 = pneg %p135
        %s244 = sand.u32 %s125, 1
        %s245 = scalar_lea.sflag [#allocation4], %s244
        %s246 = sand.u32 %s125, 1
        %s247 = smul.addr %s246, 8
        %s248 = scalar_lea.vmem [#allocation7], %s247
        %p249 = scmp.lt.s32.totalorder %s27, 1
        %s250 = scalar_select %p249, %s27, 1
        %s251 = scalar_lea.vmem %s2, %s250
        %v252 = vld [vmem:[%s211] sm:$0xff]
        %v253 = vld [vmem:[%s219] sm:$0x1]
        %v254 = vld [vmem:[%s251] sm:$0x1]
        %v255 = vmul.f32 %v252, %v252
        %256 = vadd.xlane.f32.xlu0 %v255
        %v257 = vpop.xlane.xlu0 %256
        %v258 = vmax.f32 %v257, 1e-24
        %v259 = vrsqrt.pop %v258
        %v260 = vmul.f32 %v252, %v259
        %v262 = vlaneseq
        %v263 = vshrl.u32 %v262, 7
        %v264 = vsub.s32 0, %v263
        %v265 = vrot.slane %v253, %v264
        %v267 = vmul.f32 %v260, %v265
        %v269 = vlaneseq
        %v270 = vshrl.u32 %v269, 7
        %v271 = vsub.s32 0, %v270
        %v272 = vrot.slane %v254, %v271
        %v274 = vadd.f32 %v267, %v272
        %275 = vst [vmem:[%s248] sm:$0xff] %v274
        %s276 = sand.u32 %s125, 1
        %s277 = scalar_lea.sflag [#allocation4], %s276
        %s278 = sand.u32 %s125, 1
        %s279 = smul.addr %s278, 8
        %s280 = scalar_lea.vmem [#allocation7], %s279
        // Predicated region
        $region41: #{tpu_custom_call.1} parent=31 // pred_check
          %p281 = pneg %p135
        $region42: #{tpu_custom_call.1} parent=31 // pred_check_branch
          %283 = sbr.rel (%p281) target = $region44
        $region43: #{tpu_custom_call.1} parent=31 // pred_region
          %s285 = ssub.s32 128, 128
          %286 = vsyncadd %s277, %s285
          %s287 = smul.addr %s27, 2
          %s288 = sadd.s32 %s28, %s287
          %s289 = smul.addr %s288, 128
          %s290 = scalar_lea.hbm %s3, %s289
          %s292 = sshll.u32 %s280, 4
          %s293 = int_to_ptr.vmem [resolvable:$true] %s292
          %295 = dma.vmem_to_hbm [thread:$0]  %s293, 128, %s290, %s277
        $region44: #{tpu_custom_call.1} parent=31 // pred_fallthru
          _
      $region32: #{tpu_custom_call.1} parent=5 // pred_fallthru
        _
      %p296 = scmp.le.s32.totalorder 2, %s18
      // Predicated region
      $region45: #{tpu_custom_call.1} parent=5 // pred_check
        %p297 = pneg %p296
      $region46: #{tpu_custom_call.1} parent=5 // pred_check_branch
        %299 = sbr.rel (%p297) target = $region48
      $region47: #{tpu_custom_call.1} parent=5 // pred_region
        %s300 = ssub.s32 %s18, 2
        // Predicated region
        $region49: #{tpu_custom_call.1} parent=47 // pred_check
          %p301 = pneg %p141
        $region50: #{tpu_custom_call.1} parent=47 // pred_check_branch
          %303 = sbr.rel (%p301) target = $region52
        $region51: #{tpu_custom_call.1} parent=47 // pred_region
          %s304 = sand.u32 %s126, 1
          %s305 = scalar_lea.sflag [#allocation4], %s304
          %s306 = sand.u32 %s126, 1
          %s307 = smul.addr %s306, 8
          %s308 = scalar_lea.vmem [#allocation7], %s307
          %309 = dma.done %s305, 128
        $region52: #{tpu_custom_call.1} parent=47 // pred_fallthru
          _
      $region48: #{tpu_custom_call.1} parent=5 // pred_fallthru
        _
    $region6: #{tpu_custom_call.1} parent=1 // loop_footer
      %s22 = sadd.s32 1, %s18
    $region7: #{tpu_custom_call.1} parent=1 // loop_footer_branch
      %17 = sbr.rel target = $region3
    $region8: #{tpu_custom_call.1} parent=1 // loop_exit
      _
    %310 = vsyncpa [#allocation3], 1
    %s311 = scalar_lea.sflag [#allocation3], 1
    %312 = vsyncpa %s311, 1
    %313 = vsyncpa [#allocation6], 1
    %s314 = scalar_lea.sflag [#allocation6], 1
    %315 = vsyncpa %s314, 1
    %316 = vsyncpa [#allocation4], 1
    %s317 = scalar_lea.sflag [#allocation4], 1
    %318 = vsyncpa %s317, 1

</llo_original>
